<compile_context>
chip_gen: v7x
topology: tpu7x:2x2x1
jax: 0.10.0
libtpu: 0.0.40
codegen_flags: <defaults>
</compile_context>

<pallas_src>
import math
import numpy as np
import jax
import jax.numpy as jnp
from jax.experimental import pallas as pl
from jax.experimental.pallas import tpu as pltpu

# ----- small TESS/ALBERT-like config -----
B = 2            # batch
S = 8            # sequence length
H = 32           # hidden_size
I = 64           # intermediate_size
LN_EPS = 1e-12   # layer_norm_eps
# hidden_act = 'gelu_new', hidden_dropout_prob inactive (eval), chunk size = 0
#
# NOTE: at these toy dims (H=32 < 128 lanes, I=64) every vreg is ~75% idle and
# stores are masked; tune/measure only at realistic H>=768, I>=3072.


def _round_up(a, m):
    return (a + m - 1) // m * m


# ---------------- in-kernel helpers (all f32) ----------------
def _gelu_new(x):
    # ALBERT default hidden_act 'gelu_new' (tanh approximation) -- tanh on EUP
    c = math.sqrt(2.0 / math.pi)
    return 0.5 * x * (1.0 + jnp.tanh(c * (x + 0.044715 * x * x * x)))


def _ln(x, g, b):
    mu = jnp.mean(x, axis=-1, keepdims=True)
    var = jnp.mean((x - mu) ** 2, axis=-1, keepdims=True)
    return (x - mu) * jax.lax.rsqrt(var + LN_EPS) * g + b


# ---------------- fused TESSFFN kernel ----------------
def tess_ffn_kernel(x_ref, w1_ref, b1_ref, w2_ref, b2_ref, g_ref, beta_ref,
                    o_ref, acc_ref):
    # grid = (row_blocks, k_blocks); axis 1 is the reduction over I ("arbitrary")
    k = pl.program_id(1)
    nk = pl.num_programs(1)

    @pl.when(k == 0)
    def _():
        # Fold the second-projection bias into the accumulator init.
        acc_ref[...] = jnp.broadcast_to(b2_ref[...], acc_ref.shape).astype(jnp.float32)

    x = x_ref[...]                                           # (tm, H) f32
    # Linear(H -> tk slice of I) + gelu_new   (MXU in bf16, f32 accumulate)
    h = jnp.dot(x.astype(jnp.bfloat16), w1_ref[...],
                preferred_element_type=jnp.float32) + b1_ref[...]
    h = _gelu_new(h)                                         # f32 elementwise
    # Linear(tk slice of I -> H), accumulated in f32 scratch
    acc_ref[...] += jnp.dot(h.astype(jnp.bfloat16), w2_ref[...],
                            preferred_element_type=jnp.float32)

    @pl.when(k == nk - 1)
    def _():
        # residual + full_layer_layer_norm, lane-dense (tm, H) store
        o_ref[...] = _ln(acc_ref[...] + x, g_ref[...], beta_ref[...]).astype(o_ref.dtype)


def tess_ffn(attention_output, params, *, tm=None, tk=None):
    """Pallas equivalent of TESSFFN.forward.

    attention_output: tuple whose [0] is the (B, S, H) hidden state.
    Returns (hidden_states,) + attention_output[1:].
    """
    hidden = attention_output[0]
    Bc, Sc, Hc = hidden.shape
    rows = Bc * Sc
    x2d = hidden.reshape(rows, Hc).astype(jnp.float32)       # fold batch into rows

    # Weights cast to bf16 once (halves weight HBM traffic, feeds MXU natively).
    w1 = params["ffn_w"].astype(jnp.bfloat16)                # (H, I)
    w2 = params["ffn_out_w"].astype(jnp.bfloat16)            # (I, H)
    b1 = params["ffn_b"]                                     # (1, I) f32
    b2 = params["ffn_out_b"]                                 # (1, H) f32
    g = params["ln_g"]                                       # (1, H) f32
    beta = params["ln_b"]                                    # (1, H) f32
    Ic = w1.shape[1]

    # Row tile: multiple of 8 sublanes; 256+ at realistic seq lengths.
    if tm is None:
        tm = min(256, _round_up(rows, 8))
    tm = max(8, _round_up(tm, 8))
    rows_p = _round_up(rows, tm)
    if rows_p != rows:
        x2d = jnp.pad(x2d, ((0, rows_p - rows), (0, 0)))

    # K tile over the intermediate dim (multiple of 128 at realistic dims).
    if tk is None:
        tk = Ic
    assert Ic % tk == 0
    nk = Ic // tk

    grid = (rows_p // tm, nk)

    cost = pl.CostEstimate(
        flops=4 * rows_p * Hc * Ic,                 # two matmuls
        transcendentals=rows_p * Ic,                # tanh in gelu_new
        bytes_accessed=(2 * rows_p * Hc * 4         # x in + out
                        + 2 * Hc * Ic * 2           # bf16 weights
                        + (Ic + 3 * Hc) * 4),       # biases + LN params
    )

    out2d = pl.pallas_call(
        tess_ffn_kernel,
        out_shape=jax.ShapeDtypeStruct((rows_p, Hc), jnp.float32),
        grid_spec=pltpu.PrefetchScalarGridSpec(
            num_scalar_prefetch=0,
            grid=grid,
            in_specs=[
                pl.BlockSpec((tm, Hc), lambda i, k: (i, 0)),     # x (resident over k)
                pl.BlockSpec((Hc, tk), lambda i, k: (0, k)),     # w1 k-slice
                pl.BlockSpec((1, tk), lambda i, k: (0, k)),      # b1 k-slice
                pl.BlockSpec((tk, Hc), lambda i, k: (k, 0)),     # w2 k-slice
                pl.BlockSpec((1, Hc), lambda i, k: (0, 0)),      # b2
                pl.BlockSpec((1, Hc), lambda i, k: (0, 0)),      # ln gamma
                pl.BlockSpec((1, Hc), lambda i, k: (0, 0)),      # ln beta
            ],
            out_specs=pl.BlockSpec((tm, Hc), lambda i, k: (i, 0)),
            scratch_shapes=[pltpu.VMEM((tm, Hc), jnp.float32)],  # f32 accumulator
        ),
        compiler_params=pltpu.CompilerParams(
            dimension_semantics=("parallel", "arbitrary"),
            vmem_limit_bytes=32 * 1024 * 1024,
        ),
        cost_estimate=cost,
    )(x2d, w1, b1, w2, b2, g, beta)

    hidden_out = out2d[:rows].reshape(Bc, Sc, Hc)
    return (hidden_out,) + tuple(attention_output[1:])


# ---------------- pure-JAX f32 reference (mirrors the PyTorch module) ----------------
def tess_ffn_ref(hidden, params):
    f = hidden @ params["ffn_w"] + params["ffn_b"]
    f = _gelu_new(f)
    f = f @ params["ffn_out_w"] + params["ffn_out_b"]
    return _ln(hidden + f, params["ln_g"], params["ln_b"])


# ---------------- parameters (deterministic, in-script) ----------------
def init_params(key):
    k1, k2 = jax.random.split(key, 2)

    def nrm(k, shape, scale=0.02):
        return scale * jax.random.normal(k, shape, dtype=jnp.float32)

    # weights stored (in_features, out_features) so y = x @ W + b
    return {
        "ffn_w": nrm(k1, (H, I)),
        "ffn_b": jnp.zeros((1, I), jnp.float32),
        "ffn_out_w": nrm(k2, (I, H)),
        "ffn_out_b": jnp.zeros((1, H), jnp.float32),
        "ln_g": jnp.ones((1, H), jnp.float32),
        "ln_b": jnp.zeros((1, H), jnp.float32),
    }


if __name__ == "__main__":
    key = jax.random.PRNGKey(0)
    pkey, xkey = jax.random.split(key, 2)

    params = init_params(pkey)
    attn_hidden = jax.random.normal(xkey, (B, S, H), dtype=jnp.float32)
    # attention_output tuple as produced by the attention block (extras passed through)
    attention_output = (attn_hidden,)

    # tm=8 exercises the row grid (2 row blocks) at the toy shapes; tk=None -> nk=1.
    out = tess_ffn(attention_output, params, tm=8)
    hidden_states = out[0]
    jax.block_until_ready(hidden_states)

    ref = tess_ffn_ref(attn_hidden, params)
    jax.block_until_ready(ref)

    assert hidden_states.shape == (B, S, H)
    assert np.all(np.isfinite(np.asarray(hidden_states)))
    # Tolerance relaxed vs the pure-f32 version because the MXU operands are bf16.
    np.testing.assert_allclose(np.asarray(hidden_states), np.asarray(ref),
                               rtol=2e-2, atol=2e-2)
    print("KERNEL_OK")
</pallas_src>

<mosaic_0001>
module attributes {stable_mosaic.version = 11 : i64} {
  func.func @tess_ffn_kernel(%arg0: i32, %arg1: i32, %arg2: memref<8x32xf32, #tpu.memory_space<vmem>>, %arg3: memref<32x64xbf16, #tpu.memory_space<vmem>>, %arg4: memref<1x64xf32, #tpu.memory_space<vmem>>, %arg5: memref<64x32xbf16, #tpu.memory_space<vmem>>, %arg6: memref<1x32xf32, #tpu.memory_space<vmem>>, %arg7: memref<1x32xf32, #tpu.memory_space<vmem>>, %arg8: memref<1x32xf32, #tpu.memory_space<vmem>>, %arg9: memref<8x32xf32, #tpu.memory_space<vmem>>, %arg10: memref<8x32xf32, #tpu.memory_space<vmem>>) attributes {dimension_semantics = [#tpu.dimension_semantics<parallel>, #tpu.dimension_semantics<arbitrary>], iteration_bounds = array<i64: 2, 1>, scalar_prefetch = 0 : i64, scratch_operands = 1 : i64, tpu.core_type = #tpu.core_type<tc>, window_params = [{transform_indices = @transform_0, window_bounds = array<i64: 8, 32>}, {transform_indices = @transform_1, window_bounds = array<i64: 32, 64>}, {transform_indices = @transform_2, window_bounds = array<i64: 1, 64>}, {transform_indices = @transform_3, window_bounds = array<i64: 64, 32>}, {pipeline_mode = #tpu.pipeline_mode<synchronous>, transform_indices = @transform_4, window_bounds = array<i64: 1, 32>}, {pipeline_mode = #tpu.pipeline_mode<synchronous>, transform_indices = @transform_5, window_bounds = array<i64: 1, 32>}, {pipeline_mode = #tpu.pipeline_mode<synchronous>, transform_indices = @transform_6, window_bounds = array<i64: 1, 32>}, {transform_indices = @transform_7, window_bounds = array<i64: 8, 32>}]} {
    %c0_i32 = arith.constant 0 : i32
    %0 = arith.cmpi eq, %arg1, %c0_i32 : i32
    %1 = arith.extui %0 : i1 to i32
    %c0_i32_0 = arith.constant 0 : i32
    %2 = arith.cmpi ne, %1, %c0_i32_0 : i32
    scf.if %2 {
      %c0_19 = arith.constant 0 : index
      %c0_20 = arith.constant 0 : index
      %32 = vector.load %arg6[%c0_19, %c0_20] : memref<1x32xf32, #tpu.memory_space<vmem>>, vector<1x32xf32>
      %33 = vector.shape_cast %32 : vector<1x32xf32> to vector<1x32xf32>
      %34 = vector.broadcast %33 : vector<1x32xf32> to vector<8x32xf32>
      %c0_21 = arith.constant 0 : index
      %c0_22 = arith.constant 0 : index
      %35 = vector.load %arg10[%c0_21, %c0_22] : memref<8x32xf32, #tpu.memory_space<vmem>>, vector<8x32xf32>
      tpu.vector_store %arg10[%c0_21, %c0_22], %34 {strides = array<i32>} : memref<8x32xf32, #tpu.memory_space<vmem>>, vector<8x32xf32>,
    } else {
    }
    %c0 = arith.constant 0 : index
    %c0_1 = arith.constant 0 : index
    %3 = vector.load %arg2[%c0, %c0_1] : memref<8x32xf32, #tpu.memory_space<vmem>>, vector<8x32xf32>
    %4 = arith.truncf %3 : vector<8x32xf32> to vector<8x32xbf16>
    %c0_2 = arith.constant 0 : index
    %c0_3 = arith.constant 0 : index
    %5 = vector.load %arg3[%c0_2, %c0_3] : memref<32x64xbf16, #tpu.memory_space<vmem>>, vector<32x64xbf16>
    %cst = arith.constant dense<0.000000e+00> : vector<8x64xf32>
    %6 = tpu.matmul %4, %5, %cst {dimension_numbers = #tpu.dot_dimension_numbers<[1], [0], [0], [1], [0, 0, 1, 1], [], []>} : vector<8x32xbf16>, vector<32x64xbf16>, vector<8x64xf32> -> vector<8x64xf32>
    %c0_4 = arith.constant 0 : index
    %c0_5 = arith.constant 0 : index
    %7 = vector.load %arg4[%c0_4, %c0_5] : memref<1x64xf32, #tpu.memory_space<vmem>>, vector<1x64xf32>
    %8 = vector.broadcast %7 : vector<1x64xf32> to vector<8x64xf32>
    %9 = arith.addf %6, %8 : vector<8x64xf32>
    %cst_6 = arith.constant 5.000000e-01 : f32
    %10 = vector.broadcast %cst_6 : f32 to vector<8x64xf32>
    %11 = arith.mulf %10, %9 : vector<8x64xf32>
    %cst_7 = arith.constant 4.471500e-02 : f32
    %12 = vector.broadcast %cst_7 : f32 to vector<8x64xf32>
    %13 = arith.mulf %12, %9 : vector<8x64xf32>
    %14 = arith.mulf %13, %9 : vector<8x64xf32>
    %15 = arith.mulf %14, %9 : vector<8x64xf32>
    %16 = arith.addf %9, %15 : vector<8x64xf32>
    %cst_8 = arith.constant 0.797884583 : f32
    %17 = vector.broadcast %cst_8 : f32 to vector<8x64xf32>
    %18 = arith.mulf %17, %16 : vector<8x64xf32>
    %19 = math.tanh %18 : vector<8x64xf32>
    %cst_9 = arith.constant 1.000000e+00 : f32
    %20 = vector.broadcast %cst_9 : f32 to vector<8x64xf32>
    %21 = arith.addf %20, %19 : vector<8x64xf32>
    %22 = arith.mulf %11, %21 : vector<8x64xf32>
    %c0_10 = arith.constant 0 : index
    %c0_11 = arith.constant 0 : index
    %23 = vector.load %arg10[%c0_10, %c0_11] : memref<8x32xf32, #tpu.memory_space<vmem>>, vector<8x32xf32>
    %24 = arith.truncf %22 : vector<8x64xf32> to vector<8x64xbf16>
    %c0_12 = arith.constant 0 : index
    %c0_13 = arith.constant 0 : index
    %25 = vector.load %arg5[%c0_12, %c0_13] : memref<64x32xbf16, #tpu.memory_space<vmem>>, vector<64x32xbf16>
    %cst_14 = arith.constant dense<0.000000e+00> : vector<8x32xf32>
    %26 = tpu.matmul %24, %25, %cst_14 {dimension_numbers = #tpu.dot_dimension_numbers<[1], [0], [0], [1], [0, 0, 1, 1], [], []>} : vector<8x64xbf16>, vector<64x32xbf16>, vector<8x32xf32> -> vector<8x32xf32>
    %27 = arith.addf %23, %26 : vector<8x32xf32>
    %c0_15 = arith.constant 0 : index
    %c0_16 = arith.constant 0 : index
    %28 = vector.load %arg10[%c0_15, %c0_16] : memref<8x32xf32, #tpu.memory_space<vmem>>, vector<8x32xf32>
    tpu.vector_store %arg10[%c0_15, %c0_16], %27 {strides = array<i32>} : memref<8x32xf32, #tpu.memory_space<vmem>>, vector<8x32xf32>,
    %c0_i32_17 = arith.constant 0 : i32
    %29 = arith.cmpi eq, %arg1, %c0_i32_17 : i32
    %30 = arith.extui %29 : i1 to i32
    %c0_i32_18 = arith.constant 0 : i32
    %31 = arith.cmpi ne, %30, %c0_i32_18 : i32
    scf.if %31 {
      %c0_19 = arith.constant 0 : index
      %c0_20 = arith.constant 0 : index
      %32 = vector.load %arg10[%c0_19, %c0_20] : memref<8x32xf32, #tpu.memory_space<vmem>>, vector<8x32xf32>
      %33 = arith.addf %32, %3 : vector<8x32xf32>
      %c0_21 = arith.constant 0 : index
      %c0_22 = arith.constant 0 : index
      %34 = vector.load %arg7[%c0_21, %c0_22] : memref<1x32xf32, #tpu.memory_space<vmem>>, vector<1x32xf32>
      %c0_23 = arith.constant 0 : index
      %c0_24 = arith.constant 0 : index
      %35 = vector.load %arg8[%c0_23, %c0_24] : memref<1x32xf32, #tpu.memory_space<vmem>>, vector<1x32xf32>
      %cst_25 = arith.constant dense<0.000000e+00> : vector<8xf32>
      %36 = vector.multi_reduction <add>, %33, %cst_25 [1] : vector<8x32xf32> to vector<8xf32>
      %37 = vector.shape_cast %36 : vector<8xf32> to vector<8x1xf32>
      %cst_26 = arith.constant 3.200000e+01 : f32
      %38 = vector.broadcast %cst_26 : f32 to vector<8x1xf32>
      %39 = arith.divf %37, %38 : vector<8x1xf32>
      %40 = vector.broadcast %39 : vector<8x1xf32> to vector<8x32xf32>
      %41 = arith.subf %33, %40 : vector<8x32xf32>
      %42 = arith.mulf %41, %41 : vector<8x32xf32>
      %cst_27 = arith.constant dense<0.000000e+00> : vector<8xf32>
      %43 = vector.multi_reduction <add>, %42, %cst_27 [1] : vector<8x32xf32> to vector<8xf32>
      %44 = vector.shape_cast %43 : vector<8xf32> to vector<8x1xf32>
      %cst_28 = arith.constant 3.200000e+01 : f32
      %45 = vector.broadcast %cst_28 : f32 to vector<8x1xf32>
      %46 = arith.divf %44, %45 : vector<8x1xf32>
      %47 = vector.broadcast %39 : vector<8x1xf32> to vector<8x32xf32>
      %48 = arith.subf %33, %47 : vector<8x32xf32>
      %cst_29 = arith.constant 9.99999996E-13 : f32
      %49 = vector.broadcast %cst_29 : f32 to vector<8x1xf32>
      %50 = arith.addf %46, %49 : vector<8x1xf32>
      %51 = math.rsqrt %50 : vector<8x1xf32>
      %52 = vector.broadcast %51 : vector<8x1xf32> to vector<8x32xf32>
      %53 = arith.mulf %48, %52 : vector<8x32xf32>
      %54 = vector.broadcast %34 : vector<1x32xf32> to vector<8x32xf32>
      %55 = arith.mulf %53, %54 : vector<8x32xf32>
      %56 = vector.broadcast %35 : vector<1x32xf32> to vector<8x32xf32>
      %57 = arith.addf %55, %56 : vector<8x32xf32>
      %c0_30 = arith.constant 0 : index
      %c0_31 = arith.constant 0 : index
      %58 = vector.load %arg9[%c0_30, %c0_31] : memref<8x32xf32, #tpu.memory_space<vmem>>, vector<8x32xf32>
      tpu.vector_store %arg9[%c0_30, %c0_31], %57 {strides = array<i32>} : memref<8x32xf32, #tpu.memory_space<vmem>>, vector<8x32xf32>,
    } else {
    }
    return
  }
  func.func @transform_0(%arg0: i32, %arg1: i32) -> (i32, i32) {
    %c0_i32 = arith.constant 0 : i32
    %c0_i32_0 = arith.constant 0 : i32
    return %arg0, %c0_i32 : i32, i32
  }
  func.func @transform_1(%arg0: i32, %arg1: i32) -> (i32, i32) {
    %c0_i32 = arith.constant 0 : i32
    %c0_i32_0 = arith.constant 0 : i32
    return %c0_i32, %arg1 : i32, i32
  }
  func.func @transform_2(%arg0: i32, %arg1: i32) -> (i32, i32) {
    %c0_i32 = arith.constant 0 : i32
    %c0_i32_0 = arith.constant 0 : i32
    return %c0_i32, %arg1 : i32, i32
  }
  func.func @transform_3(%arg0: i32, %arg1: i32) -> (i32, i32) {
    %c0_i32 = arith.constant 0 : i32
    %c0_i32_0 = arith.constant 0 : i32
    return %arg1, %c0_i32 : i32, i32
  }
  func.func @transform_4(%arg0: i32, %arg1: i32) -> (i32, i32) {
    %c0_i32 = arith.constant 0 : i32
    %c0_i32_0 = arith.constant 0 : i32
    %c0_i32_1 = arith.constant 0 : i32
    return %c0_i32, %c0_i32_0 : i32, i32
  }
  func.func @transform_5(%arg0: i32, %arg1: i32) -> (i32, i32) {
    %c0_i32 = arith.constant 0 : i32
    %c0_i32_0 = arith.constant 0 : i32
    %c0_i32_1 = arith.constant 0 : i32
    return %c0_i32, %c0_i32_0 : i32, i32
  }
  func.func @transform_6(%arg0: i32, %arg1: i32) -> (i32, i32) {
    %c0_i32 = arith.constant 0 : i32
    %c0_i32_0 = arith.constant 0 : i32
    %c0_i32_1 = arith.constant 0 : i32
    return %c0_i32, %c0_i32_0 : i32, i32
  }
  func.func @transform_7(%arg0: i32, %arg1: i32) -> (i32, i32) {
    %c0_i32 = arith.constant 0 : i32
    %c0_i32_0 = arith.constant 0 : i32
    return %arg0, %c0_i32 : i32, i32
  }
}

</mosaic_0001>

<llo_original>
// kernel: tpu_custom_call.1
$region0: #{tpu_custom_call.1}
  #allocation0 [shape = 'u32[]', space=smem, size = 0x4, offset = 0x4, fixed_abs, tag = 'smem constant byte address 0x4 - core index']
  #allocation1 [shape = 'u32[144,128]{1,0:T(1,128)}', space=vmem, size = 0x12000, scoped, tag = 'internal scratch']
  #allocation2 [shape = 'f32[8,32]{1,0:T(8,128)}', space=vmem, size = 0x1000, scoped, tag = 'scratch operand']
  %s0 = inlined_call_operand.vmem [shape: f32[16,32], index: 0, kind: input, shape index: {}]
  %s1 = inlined_call_operand.vmem [shape: bf16[32,64], index: 1, kind: input, shape index: {}]
  %s2 = inlined_call_operand.vmem [shape: f32[1,64], index: 2, kind: input, shape index: {}]
  %s3 = inlined_call_operand.vmem [shape: bf16[64,32], index: 3, kind: input, shape index: {}]
  %s4 = inlined_call_operand.vmem [shape: f32[1,32], index: 4, kind: input, shape index: {}]
  %s5 = inlined_call_operand.vmem [shape: f32[1,32], index: 5, kind: input, shape index: {}]
  %s6 = inlined_call_operand.vmem [shape: f32[1,32], index: 6, kind: input, shape index: {}]
  %s7 = inlined_call_operand.hbm [shape: f32[16,32], index: 7, kind: output, shape index: {}]
  %s8 = sld [smem:[#allocation0]]
  $region69: #{tpu_custom_call.1} parent=0
    _
  %s10 = ssub.s32 1, %s8
  %s11 = scalar_select 0, %s10, %s8
  $region1: #{tpu_custom_call.1} parent=0
    #allocation3 [shape = 'u8[8192]{0}', space=vmem, size = 0x2000, scoped, tag = 'output window, operand 0']
    #allocation4 [shape = 's32[2]{0}', space=sflag, size = 0x8, scoped, tag = 'scoped memory for tpu_custom_call.1']
    %12 = vsyncpa [#allocation4], 0
    %s13 = scalar_lea.sflag [#allocation4], 1
    %14 = vsyncpa %s13, 0
    loop: start=0, step=1, limit=4
    $region2: #{tpu_custom_call.1} parent=1 // loop_pre_header
      _
    $region3: #{tpu_custom_call.1} parent=1 // loop_header
      %s16 = sphi 0, %s20
      %p17 = scmp.ge.s32.totalorder %s16, 4
      %s23 = sphi 0, %s35
      %s24 = sphi 0, %s31
      %s25 = sphi 0, %s23
      %s26 = sphi 0, %s24
      %s27 = sphi 0, %s25
      %s28 = sphi 0, %s26
      %s38 = sphi 0, %s40
      %s41 = sphi 0, %s38
      %s42 = sphi 0, %s41
      %s58 = sphi 0, %s42
      %s64 = sphi 0, %s66
      %s67 = sphi 0, %s64
      %s68 = sphi 0, %s67
      %s84 = sphi 0, %s68
      %s90 = sphi 0, %s92
      %s93 = sphi 0, %s90
      %s94 = sphi 0, %s93
      %s110 = sphi 0, %s94
      %s116 = sphi 0, %s118
      %s119 = sphi 0, %s116
      %s120 = sphi 0, %s119
      %s136 = sphi 0, %s120
      %s140 = sphi 0, %s140
      %s142 = sphi 0, %s140
      %s143 = sphi 0, %s142
      %s157 = sphi 0, %s143
      %s161 = sphi 0, %s161
      %s163 = sphi 0, %s161
      %s164 = sphi 0, %s163
      %s178 = sphi 0, %s164
      %s182 = sphi 0, %s182
      %s184 = sphi 0, %s182
      %s185 = sphi 0, %s184
      %s199 = sphi 0, %s185
      %s205 = sphi 0, %s207
      %s208 = sphi 0, %s205
      %s209 = sphi 0, %s208
      %s225 = sphi 0, %s209
    $region4: #{tpu_custom_call.1} parent=1 // loop_header_branch
      %19 = sbr.rel (%p17) target = $region8
    $region5: #{tpu_custom_call.1} parent=1 // loop_body
      %s21 = ssub.s32 %s16, 1
      %s22 = ssub.s32 %s16, 2
      %s29 = sadd.s32 1, %s24
      %p30 = scmp.ge.s32.totalorder %s29, 1
      %s31 = scalar_select %p30, 0, %s29
      %s32 = sadd.s32 1, %s23
      %s33 = scalar_select %p30, %s32, %s23
      %p34 = scmp.ge.s32.totalorder %s33, 2
      %s35 = scalar_select %p34, 0, %s33
      %s36 = ssub.s32 %s23, %s35
      %p37 = scmp.eq.s32.totalorder %s36, 0
      %s39 = sadd.s32 %s38, 1
      %s40 = scalar_select %p37, %s38, %s39
      %p43 = pneg %p37
      %p44 = scmp.eq.s32.totalorder %s16, 1
      %p45 = por %p43, %p44
      %p46 = scmp.ne.s32.totalorder %s38, %s41
      %p47 = scmp.eq.s32.totalorder %s16, 0
      %p48 = por %p46, %p47
      %p49 = scmp.ne.s32.totalorder %s38, %s41
      %p50 = scmp.eq.s32.totalorder %s21, 1
      %p51 = por %p49, %p50
      %p52 = scmp.ne.s32.totalorder %s41, %s42
      %p53 = scmp.eq.s32.totalorder %s21, 0
      %p54 = por %p52, %p53
      %p55 = scmp.ne.s32.totalorder %s41, %s42
      %p56 = scmp.eq.s32.totalorder %s22, 1
      %p57 = por %p55, %p56
      %p59 = scmp.ne.s32.totalorder %s42, %s58
      %p60 = scmp.eq.s32.totalorder %s22, 0
      %p61 = por %p59, %p60
      %s62 = ssub.s32 %s24, %s31
      %p63 = scmp.eq.s32.totalorder %s62, 0
      %s65 = sadd.s32 %s64, 1
      %s66 = scalar_select %p63, %s64, %s65
      %p69 = pneg %p63
      %p70 = scmp.eq.s32.totalorder %s16, 1
      %p71 = por %p69, %p70
      %p72 = scmp.ne.s32.totalorder %s64, %s67
      %p73 = scmp.eq.s32.totalorder %s16, 0
      %p74 = por %p72, %p73
      %p75 = scmp.ne.s32.totalorder %s64, %s67
      %p76 = scmp.eq.s32.totalorder %s21, 1
      %p77 = por %p75, %p76
      %p78 = scmp.ne.s32.totalorder %s67, %s68
      %p79 = scmp.eq.s32.totalorder %s21, 0
      %p80 = por %p78, %p79
      %p81 = scmp.ne.s32.totalorder %s67, %s68
      %p82 = scmp.eq.s32.totalorder %s22, 1
      %p83 = por %p81, %p82
      %p85 = scmp.ne.s32.totalorder %s68, %s84
      %p86 = scmp.eq.s32.totalorder %s22, 0
      %p87 = por %p85, %p86
      %s88 = ssub.s32 %s24, %s31
      %p89 = scmp.eq.s32.totalorder %s88, 0
      %s91 = sadd.s32 %s90, 1
      %s92 = scalar_select %p89, %s90, %s91
      %p95 = pneg %p89
      %p96 = scmp.eq.s32.totalorder %s16, 1
      %p97 = por %p95, %p96
      %p98 = scmp.ne.s32.totalorder %s90, %s93
      %p99 = scmp.eq.s32.totalorder %s16, 0
      %p100 = por %p98, %p99
      %p101 = scmp.ne.s32.totalorder %s90, %s93
      %p102 = scmp.eq.s32.totalorder %s21, 1
      %p103 = por %p101, %p102
      %p104 = scmp.ne.s32.totalorder %s93, %s94
      %p105 = scmp.eq.s32.totalorder %s21, 0
      %p106 = por %p104, %p105
      %p107 = scmp.ne.s32.totalorder %s93, %s94
      %p108 = scmp.eq.s32.totalorder %s22, 1
      %p109 = por %p107, %p108
      %p111 = scmp.ne.s32.totalorder %s94, %s110
      %p112 = scmp.eq.s32.totalorder %s22, 0
      %p113 = por %p111, %p112
      %s114 = ssub.s32 %s24, %s31
      %p115 = scmp.eq.s32.totalorder %s114, 0
      %s117 = sadd.s32 %s116, 1
      %s118 = scalar_select %p115, %s116, %s117
      %p121 = pneg %p115
      %p122 = scmp.eq.s32.totalorder %s16, 1
      %p123 = por %p121, %p122
      %p124 = scmp.ne.s32.totalorder %s116, %s119
      %p125 = scmp.eq.s32.totalorder %s16, 0
      %p126 = por %p124, %p125
      %p127 = scmp.ne.s32.totalorder %s116, %s119
      %p128 = scmp.eq.s32.totalorder %s21, 1
      %p129 = por %p127, %p128
      %p130 = scmp.ne.s32.totalorder %s119, %s120
      %p131 = scmp.eq.s32.totalorder %s21, 0
      %p132 = por %p130, %p131
      %p133 = scmp.ne.s32.totalorder %s119, %s120
      %p134 = scmp.eq.s32.totalorder %s22, 1
      %p135 = por %p133, %p134
      %p137 = scmp.ne.s32.totalorder %s120, %s136
      %p138 = scmp.eq.s32.totalorder %s22, 0
      %p139 = por %p137, %p138
      %s141 = sadd.s32 %s140, 1
      %p144 = scmp.eq.s32.totalorder %s16, 1
      %p145 = scmp.ne.s32.totalorder %s140, %s142
      %p146 = scmp.eq.s32.totalorder %s16, 0
      %p147 = por %p145, %p146
      %p148 = scmp.ne.s32.totalorder %s140, %s142
      %p149 = scmp.eq.s32.totalorder %s21, 1
      %p150 = por %p148, %p149
      %p151 = scmp.ne.s32.totalorder %s142, %s143
      %p152 = scmp.eq.s32.totalorder %s21, 0
      %p153 = por %p151, %p152
      %p154 = scmp.ne.s32.totalorder %s142, %s143
      %p155 = scmp.eq.s32.totalorder %s22, 1
      %p156 = por %p154, %p155
      %p158 = scmp.ne.s32.totalorder %s143, %s157
      %p159 = scmp.eq.s32.totalorder %s22, 0
      %p160 = por %p158, %p159
      %s162 = sadd.s32 %s161, 1
      %p165 = scmp.eq.s32.totalorder %s16, 1
      %p166 = scmp.ne.s32.totalorder %s161, %s163
      %p167 = scmp.eq.s32.totalorder %s16, 0
      %p168 = por %p166, %p167
      %p169 = scmp.ne.s32.totalorder %s161, %s163
      %p170 = scmp.eq.s32.totalorder %s21, 1
      %p171 = por %p169, %p170
      %p172 = scmp.ne.s32.totalorder %s163, %s164
      %p173 = scmp.eq.s32.totalorder %s21, 0
      %p174 = por %p172, %p173
      %p175 = scmp.ne.s32.totalorder %s163, %s164
      %p176 = scmp.eq.s32.totalorder %s22, 1
      %p177 = por %p175, %p176
      %p179 = scmp.ne.s32.totalorder %s164, %s178
      %p180 = scmp.eq.s32.totalorder %s22, 0
      %p181 = por %p179, %p180
      %s183 = sadd.s32 %s182, 1
      %p186 = scmp.eq.s32.totalorder %s16, 1
      %p187 = scmp.ne.s32.totalorder %s182, %s184
      %p188 = scmp.eq.s32.totalorder %s16, 0
      %p189 = por %p187, %p188
      %p190 = scmp.ne.s32.totalorder %s182, %s184
      %p191 = scmp.eq.s32.totalorder %s21, 1
      %p192 = por %p190, %p191
      %p193 = scmp.ne.s32.totalorder %s184, %s185
      %p194 = scmp.eq.s32.totalorder %s21, 0
      %p195 = por %p193, %p194
      %p196 = scmp.ne.s32.totalorder %s184, %s185
      %p197 = scmp.eq.s32.totalorder %s22, 1
      %p198 = por %p196, %p197
      %p200 = scmp.ne.s32.totalorder %s185, %s199
      %p201 = scmp.eq.s32.totalorder %s22, 0
      %p202 = por %p200, %p201
      %s203 = ssub.s32 %s23, %s35
      %p204 = scmp.eq.s32.totalorder %s203, 0
      %s206 = sadd.s32 %s205, 1
      %s207 = scalar_select %p204, %s205, %s206
      %p210 = pneg %p204
      %p211 = scmp.eq.s32.totalorder %s16, 1
      %p212 = por %p210, %p211
      %p213 = scmp.ne.s32.totalorder %s205, %s208
      %p214 = scmp.eq.s32.totalorder %s16, 0
      %p215 = por %p213, %p214
      %p216 = scmp.ne.s32.totalorder %s205, %s208
      %p217 = scmp.eq.s32.totalorder %s21, 1
      %p218 = por %p216, %p217
      %p219 = scmp.ne.s32.totalorder %s208, %s209
      %p220 = scmp.eq.s32.totalorder %s21, 0
      %p221 = por %p219, %p220
      %p222 = scmp.ne.s32.totalorder %s208, %s209
      %p223 = scmp.eq.s32.totalorder %s22, 1
      %p224 = por %p222, %p223
      %p226 = scmp.ne.s32.totalorder %s209, %s225
      %p227 = scmp.eq.s32.totalorder %s22, 0
      %p228 = por %p226, %p227
      %p229 = scmp.le.s32.totalorder 1, %s16
      %p230 = scmp.lt.s32.totalorder %s16, 3
      %p231 = pnand %p229, %p230
      %p232 = pneg %p231
      // Predicated region
      $region9: #{tpu_custom_call.1} parent=5 // pred_check
        _
      $region10: #{tpu_custom_call.1} parent=5 // pred_check_branch
        %234 = sbr.rel (%p231) target = $region12
      $region11: #{tpu_custom_call.1} parent=5 // pred_region
        %s235 = ssub.s32 %s16, 1
        // Predicated region
        $region13: #{tpu_custom_call.1} parent=11 // pred_check
          %p236 = pneg %p80
        $region14: #{tpu_custom_call.1} parent=11 // pred_check_branch
          %238 = sbr.rel (%p236) target = $region16
        $region15: #{tpu_custom_call.1} parent=11 // pred_region
          %p239 = scmp.lt.s32.totalorder %s26, 0
          %s240 = scalar_select %p239, %s26, 0
          %s241 = smul.addr %s240, 4
          %s242 = scalar_lea.vmem %s1, %s241
        $region16: #{tpu_custom_call.1} parent=11 // pred_fallthru
          _
        // Predicated region
        $region17: #{tpu_custom_call.1} parent=11 // pred_check
          %p243 = pneg %p106
        $region18: #{tpu_custom_call.1} parent=11 // pred_check_branch
          %245 = sbr.rel (%p243) target = $region20
        $region19: #{tpu_custom_call.1} parent=11 // pred_region
          %p246 = scmp.lt.s32.totalorder %s26, 0
          %s247 = scalar_select %p246, %s26, 0
          %s248 = scalar_lea.vmem %s2, %s247
        $region20: #{tpu_custom_call.1} parent=11 // pred_fallthru
          _
        // Predicated region
        $region21: #{tpu_custom_call.1} parent=11 // pred_check
          %p249 = pneg %p132
        $region22: #{tpu_custom_call.1} parent=11 // pred_check_branch
          %251 = sbr.rel (%p249) target = $region24
        $region23: #{tpu_custom_call.1} parent=11 // pred_region
          %s252 = smul.u32 8, %s26
          %p253 = scmp.lt.s32.totalorder %s252, 7
          %s254 = scalar_select %p253, %s252, 7
          %s255 = smul.addr %s254, 4
          %s256 = scalar_lea.vmem %s3, %s255
          %s257 = smul.u32 8, %s26
        $region24: #{tpu_custom_call.1} parent=11 // pred_fallthru
          _
        // Predicated region
        $region25: #{tpu_custom_call.1} parent=11 // pred_check
          %p258 = pneg %p153
        $region26: #{tpu_custom_call.1} parent=11 // pred_check_branch
          %260 = sbr.rel (%p258) target = $region28
        $region27: #{tpu_custom_call.1} parent=11 // pred_region
          _
        $region28: #{tpu_custom_call.1} parent=11 // pred_fallthru
          _
        // Predicated region
        $region29: #{tpu_custom_call.1} parent=11 // pred_check
          %p261 = pneg %p174
        $region30: #{tpu_custom_call.1} parent=11 // pred_check_branch
          %263 = sbr.rel (%p261) target = $region32
        $region31: #{tpu_custom_call.1} parent=11 // pred_region
          _
        $region32: #{tpu_custom_call.1} parent=11 // pred_fallthru
          _
        // Predicated region
        $region33: #{tpu_custom_call.1} parent=11 // pred_check
          %p264 = pneg %p195
        $region34: #{tpu_custom_call.1} parent=11 // pred_check_branch
          %266 = sbr.rel (%p264) target = $region36
        $region35: #{tpu_custom_call.1} parent=11 // pred_region
          _
        $region36: #{tpu_custom_call.1} parent=11 // pred_fallthru
          _
      $region12: #{tpu_custom_call.1} parent=5 // pred_fallthru
        _
      %p267 = scmp.lt.s32.totalorder %s16, 2
      // Predicated region
      $region37: #{tpu_custom_call.1} parent=5 // pred_check
        %p268 = pneg %p267
      $region38: #{tpu_custom_call.1} parent=5 // pred_check_branch
        %270 = sbr.rel (%p268) target = $region40
      $region39: #{tpu_custom_call.1} parent=5 // pred_region
        // Predicated region
        $region41: #{tpu_custom_call.1} parent=39 // pred_check
          %p271 = pneg %p48
        $region42: #{tpu_custom_call.1} parent=39 // pred_check_branch
          %273 = sbr.rel (%p271) target = $region44
        $region43: #{tpu_custom_call.1} parent=39 // pred_region
          %p274 = scmp.lt.s32.totalorder %s23, 1
          %s275 = scalar_select %p274, %s23, 1
          %s276 = smul.addr %s275, 8
          %s277 = scalar_lea.vmem %s0, %s276
        $region44: #{tpu_custom_call.1} parent=39 // pred_fallthru
          _
      $region40: #{tpu_custom_call.1} parent=5 // pred_fallthru
        _
      %p278 = scmp.le.s32.totalorder 1, %s16
      %p279 = scmp.lt.s32.totalorder %s16, 3
      %p280 = pnand %p278, %p279
      %p281 = pneg %p280
      // Predicated region
      $region45: #{tpu_custom_call.1} parent=5 // pred_check
        _
      $region46: #{tpu_custom_call.1} parent=5 // pred_check_branch
        %283 = sbr.rel (%p280) target = $region48
      $region47: #{tpu_custom_call.1} parent=5 // pred_region
        %s284 = ssub.s32 %s16, 1
        %p285 = scmp.lt.s32.totalorder %s25, 1
        %s286 = scalar_select %p285, %s25, 1
        %s287 = smul.addr %s286, 8
        %s288 = scalar_lea.vmem %s0, %s287
        %p289 = pneg %p54
        %p290 = pneg %p51
        %p291 = scmp.lt.s32.totalorder %s26, 0
        %s292 = scalar_select %p291, %s26, 0
        %s293 = smul.addr %s292, 4
        %s294 = scalar_lea.vmem %s1, %s293
        %p295 = pneg %p80
        %p296 = pneg %p77
        %p297 = scmp.lt.s32.totalorder %s26, 0
        %s298 = scalar_select %p297, %s26, 0
        %s299 = scalar_lea.vmem %s2, %s298
        %p300 = pneg %p106
        %p301 = pneg %p103
        %s302 = smul.u32 8, %s26
        %p303 = scmp.lt.s32.totalorder %s302, 7
        %s304 = scalar_select %p303, %s302, 7
        %s305 = smul.addr %s304, 4
        %s306 = scalar_lea.vmem %s3, %s305
        %p307 = pneg %p132
        %p308 = pneg %p129
        %p309 = pneg %p153
        %p310 = pneg %p150
        %p311 = pneg %p174
        %p312 = pneg %p171
        %p313 = pneg %p195
        %p314 = pneg %p192
        %p315 = pneg %p221
        %p316 = pneg %p218
        %s317 = sand.u32 %s208, 1
        %s318 = scalar_lea.sflag [#allocation4], %s317
        %s319 = sand.u32 %s208, 1
        %s320 = smul.addr %s319, 8
        %s321 = scalar_lea.vmem [#allocation3], %s320
        %p322 = scmp.lt.s32.totalorder %s25, 1
        %s323 = scalar_select %p322, %s25, 1
        %s324 = smul.addr %s323, 8
        %s325 = scalar_lea.vmem %s0, %s324
        %p326 = scmp.lt.s32.totalorder %s26, 0
        %s327 = scalar_select %p326, %s26, 0
        %s328 = smul.addr %s327, 4
        %s329 = scalar_lea.vmem %s1, %s328
        %p330 = scmp.lt.s32.totalorder %s26, 0
        %s331 = scalar_select %p330, %s26, 0
        %s332 = scalar_lea.vmem %s2, %s331
        %s333 = smul.u32 8, %s26
        %p334 = scmp.lt.s32.totalorder %s333, 7
        %s335 = scalar_select %p334, %s333, 7
        %s336 = smul.addr %s335, 4
        %s337 = scalar_lea.vmem %s3, %s336
        %s338 = smul.u32 8, %s26
        %p340 = scmp.eq.s32.totalorder %s26, 0
        // Predicated region
        $region49: #{tpu_custom_call.1} parent=47 // pred_check
          %p341 = pneg %p340
        $region50: #{tpu_custom_call.1} parent=47 // pred_check_branch
          %343 = sbr.rel (%p341) target = $region52
        $region51: #{tpu_custom_call.1} parent=47 // pred_region
          %v344 = vld [vmem:[%s4] sm:$0x1]
          %v346 = vlaneseq
          %v347 = vshrl.u32 %v346, 7
          %v348 = vsub.s32 0, %v347
          %v349 = vrot.slane %v344, %v348
          %vm351 = vcmask 261120
          %352 = vst.msk [vmem:[#allocation2] sm:$0xff] %vm351, %v349
        $region52: #{tpu_custom_call.1} parent=47 // pred_fallthru
          _
        %v353 = vld [vmem:[%s325] sm:$0xff]
        %v354 = vpack.c.bf16 %v353, %v353
        %v355 = vld [vmem:[%s329] sm:$0xf]
        %v356 = vld [vmem:[%s329 + $0x4] sm:$0xf]
        %v357 = vld [vmem:[%s329 + $0x8] sm:$0xf]
        %v358 = vld [vmem:[%s329 + $0xc] sm:$0xf]
        %v359 = vld [vmem:[%s332] sm:$0x1]
        %v361 = vlaneseq
        %v362 = vshrl.u32 %v361, 7
        %v363 = vsub.s32 0, %v362
        %v364 = vrot.slane %v359, %v363
        %v370 = vunpack.c.l.b16 %v355
        %v371 = vunpack.c.l.b16 %v356
        %v372 = vunpack.c.l.b16 %v357
        %v373 = vunpack.c.l.b16 %v358
        %v374 = vpack.c.b16 %v371, %v370
        %v375 = vpack.c.b16 %v373, %v372
        %vm378 = vcmask 261120
        %v380 = vsel %vm378, %v354, 0
        %382 = vmatprep.subr.bf16.mxu0 0
        %383 = vmatpush1.bf16.msra.mxu0 %v374
        %384 = vmatprep.subr.bf16.mxu0 0
        %385 = vmatpush1.bf16.msra.mxu0 %v375
        %386 = vmatprep.subr.bf16.mxu0 0
        %387 = vmatpush1.bf16.msra.mxu0 0
        %388 = vmatprep.subr.bf16.mxu0 0
        %389 = vmatpush1.bf16.msra.mxu0 0
        %390 = vmatprep.subr.bf16.mxu0 0
        %391 = vmatpush1.bf16.msra.mxu0 0
        %392 = vmatprep.subr.bf16.mxu0 0
        %393 = vmatpush1.bf16.msra.mxu0 0
        %394 = vmatprep.subr.bf16.mxu0 0
        %395 = vmatpush1.bf16.msra.mxu0 0
        %396 = vmatprep.subr.bf16.mxu0 0
        %397 = vmatpush1.bf16.msra.mxu0 0
        %398 = vmatprep.subr.bf16.mxu0 0
        %399 = vmatpush1.bf16.msra.mxu0 0
        %400 = vmatprep.subr.bf16.mxu0 0
        %401 = vmatpush1.bf16.msra.mxu0 0
        %402 = vmatprep.subr.bf16.mxu0 0
        %403 = vmatpush1.bf16.msra.mxu0 0
        %404 = vmatprep.subr.bf16.mxu0 0
        %405 = vmatpush1.bf16.msra.mxu0 0
        %406 = vmatprep.subr.bf16.mxu0 0
        %407 = vmatpush1.bf16.msra.mxu0 0
        %408 = vmatprep.subr.bf16.mxu0 0
        %409 = vmatpush1.bf16.msra.mxu0 0
        %410 = vmatprep.subr.bf16.mxu0 0
        %411 = vmatpush1.bf16.msra.mxu0 0
        %412 = vmatprep.subr.bf16.mxu0 0
        %413 = vmatpush1.bf16.msra.mxu0 0
        %414 = vmatprep.mubr.bf16.mxu0 0
        %415 = vmatmul.mubr.bf16.gmra.mrb[0].mxu0 %v380
        %v416 = vpop.f32.mrb[0].mxu0
        %v417 = vadd.f32 %v364, %v416
        %v418 = vpop.f32.mrb[0].mxu0
        %v419 = vpop.f32.mrb[0].mxu0
        %v420 = vpop.f32.mrb[0].mxu0
        %421 = vdwg.mxu0
        %v422 = vmul.f32 %v417, 0.5
        %v423 = vmul.f32 %v417, 0.044715
        %v424 = vmul.f32 %v423, %v417
        %v425 = vmul.f32 %v424, %v417
        %v426 = vadd.f32 %v417, %v425
        %v427 = vmul.f32 %v426, 0.7978846
        %v428 = vtanh.pop %v427
        %v429 = vadd.f32 %v428, 1.0
        %v430 = vmul.f32 %v422, %v429
        %v431 = vld [vmem:[#allocation2] sm:$0xff]
        %v432 = vpack.c.bf16 %v430, %v430
        %v433 = vld [vmem:[%s337] sm:$0xf]
        %v434 = vld [vmem:[%s337 + $0x4] sm:$0xf]
        %v435 = vld [vmem:[%s337 + $0x8] sm:$0xf]
        %v436 = vld [vmem:[%s337 + $0xc] sm:$0xf]
        %v437 = vld [vmem:[%s337 + $0x10] sm:$0xf]
        %v438 = vld [vmem:[%s337 + $0x14] sm:$0xf]
        %v439 = vld [vmem:[%s337 + $0x18] sm:$0xf]
        %v440 = vld [vmem:[%s337 + $0x1c] sm:$0xf]
        %v449 = vunpack.c.l.b16 %v433
        %v450 = vunpack.c.l.b16 %v434
        %v451 = vunpack.c.l.b16 %v435
        %v452 = vunpack.c.l.b16 %v436
        %v453 = vunpack.c.l.b16 %v437
        %v454 = vunpack.c.l.b16 %v438
        %v455 = vunpack.c.l.b16 %v439
        %v456 = vunpack.c.l.b16 %v440
        %v457 = vpack.c.b16 %v450, %v449
        %v458 = vpack.c.b16 %v452, %v451
        %v459 = vpack.c.b16 %v454, %v453
        %v460 = vpack.c.b16 %v456, %v455
        %vm465 = vcmask 523264
        %v467 = vsel %vm465, %v432, 0
        %469 = vmatprep.subr.bf16.mxu0 0
        %470 = vmatpush1.bf16.msra.mxu0 %v457
        %471 = vmatprep.subr.bf16.mxu0 0
        %472 = vmatpush1.bf16.msra.mxu0 %v458
        %473 = vmatprep.subr.bf16.mxu0 0
        %474 = vmatpush1.bf16.msra.mxu0 %v459
        %475 = vmatprep.subr.bf16.mxu0 0
        %476 = vmatpush1.bf16.msra.mxu0 %v460
        %477 = vmatprep.subr.bf16.mxu0 0
        %478 = vmatpush1.bf16.msra.mxu0 0
        %479 = vmatprep.subr.bf16.mxu0 0
        %480 = vmatpush1.bf16.msra.mxu0 0
        %481 = vmatprep.subr.bf16.mxu0 0
        %482 = vmatpush1.bf16.msra.mxu0 0
        %483 = vmatprep.subr.bf16.mxu0 0
        %484 = vmatpush1.bf16.msra.mxu0 0
        %485 = vmatprep.subr.bf16.mxu0 0
        %486 = vmatpush1.bf16.msra.mxu0 0
        %487 = vmatprep.subr.bf16.mxu0 0
        %488 = vmatpush1.bf16.msra.mxu0 0
        %489 = vmatprep.subr.bf16.mxu0 0
        %490 = vmatpush1.bf16.msra.mxu0 0
        %491 = vmatprep.subr.bf16.mxu0 0
        %492 = vmatpush1.bf16.msra.mxu0 0
        %493 = vmatprep.subr.bf16.mxu0 0
        %494 = vmatpush1.bf16.msra.mxu0 0
        %495 = vmatprep.subr.bf16.mxu0 0
        %496 = vmatpush1.bf16.msra.mxu0 0
        %497 = vmatprep.subr.bf16.mxu0 0
        %498 = vmatpush1.bf16.msra.mxu0 0
        %499 = vmatprep.subr.bf16.mxu0 0
        %500 = vmatpush1.bf16.msra.mxu0 0
        %501 = vmatprep.mubr.bf16.mxu0 0
        %502 = vmatmul.mubr.bf16.gmra.mrb[0].mxu0 %v467
        %v503 = vpop.f32.mrb[0].mxu0
        %v504 = vadd.f32 0.0, %v503
        %v505 = vpop.f32.mrb[0].mxu0
        %v506 = vpop.f32.mrb[0].mxu0
        %v507 = vpop.f32.mrb[0].mxu0
        %508 = vdwg.mxu0
        %v509 = vadd.f32 %v431, %v504
        %510 = vst.msk [vmem:[#allocation2] sm:$0xff] %vm378, %v509
        // Predicated region
        $region53: #{tpu_custom_call.1} parent=47 // pred_check
          %p511 = pneg %p340
        $region54: #{tpu_custom_call.1} parent=47 // pred_check_branch
          %513 = sbr.rel (%p511) target = $region56
        $region55: #{tpu_custom_call.1} parent=47 // pred_region
          %v514 = vld [vmem:[#allocation2] sm:$0xff]
          %v515 = vadd.f32 %v514, %v353
          %v516 = vld [vmem:[%s5] sm:$0x1]
          %v517 = vld [vmem:[%s6] sm:$0x1]
          %v518 = vsel %vm378, %v515, 0.0
          %519 = vadd.xlane.f32.xlu0 %v518
          %v520 = vpop.xlane.xlu0 %519
          %v521 = vrcp.pop 32.0
          %v522 = vmul.f32 %v520, %v521
          %v523 = vsub.f32 %v515, %v522
          %v524 = vmul.f32 %v523, %v523
          %v525 = vsel %vm378, %v524, 0.0
          %526 = vadd.xlane.f32.xlu0 %v525
          %v527 = vpop.xlane.xlu0 %526
          %v528 = vmul.f32 %v527, %v521
          %v529 = vadd.f32 %v528, 1e-12
          %v530 = vrsqrt.pop %v529
          %v531 = vmul.f32 %v523, %v530
          %v533 = vlaneseq
          %v534 = vshrl.u32 %v533, 7
          %v535 = vsub.s32 0, %v534
          %v536 = vrot.slane %v516, %v535
          %v538 = vmul.f32 %v531, %v536
          %v540 = vlaneseq
          %v541 = vshrl.u32 %v540, 7
          %v542 = vsub.s32 0, %v541
          %v543 = vrot.slane %v517, %v542
          %v545 = vadd.f32 %v538, %v543
          %546 = vst.msk [vmem:[%s321] sm:$0xff] %vm378, %v545
        $region56: #{tpu_custom_call.1} parent=47 // pred_fallthru
          _
        %s547 = sand.u32 %s208, 1
        %s548 = scalar_lea.sflag [#allocation4], %s547
        %s549 = sand.u32 %s208, 1
        %s550 = smul.addr %s549, 8
        %s551 = scalar_lea.vmem [#allocation3], %s550
        // Predicated region
        $region57: #{tpu_custom_call.1} parent=47 // pred_check
          %p552 = pneg %p218
        $region58: #{tpu_custom_call.1} parent=47 // pred_check_branch
          %554 = sbr.rel (%p552) target = $region60
        $region59: #{tpu_custom_call.1} parent=47 // pred_region
          %s556 = ssub.s32 128, 128
          %557 = vsyncadd %s548, %s556
          %s558 = smul.addr %s25, 128
          %s559 = scalar_lea.hbm %s7, %s558
          %s561 = sshll.u32 %s551, 4
          %s562 = int_to_ptr.vmem [resolvable:$true] %s561
          %564 = dma.vmem_to_hbm [thread:$0]  %s562, 128, %s559, %s548
        $region60: #{tpu_custom_call.1} parent=47 // pred_fallthru
          _
      $region48: #{tpu_custom_call.1} parent=5 // pred_fallthru
        _
      %p565 = scmp.le.s32.totalorder 2, %s16
      // Predicated region
      $region61: #{tpu_custom_call.1} parent=5 // pred_check
        %p566 = pneg %p565
      $region62: #{tpu_custom_call.1} parent=5 // pred_check_branch
        %568 = sbr.rel (%p566) target = $region64
      $region63: #{tpu_custom_call.1} parent=5 // pred_region
        %s569 = ssub.s32 %s16, 2
        // Predicated region
        $region65: #{tpu_custom_call.1} parent=63 // pred_check
          %p570 = pneg %p224
        $region66: #{tpu_custom_call.1} parent=63 // pred_check_branch
          %572 = sbr.rel (%p570) target = $region68
        $region67: #{tpu_custom_call.1} parent=63 // pred_region
          %s573 = sand.u32 %s209, 1
          %s574 = scalar_lea.sflag [#allocation4], %s573
          %s575 = sand.u32 %s209, 1
          %s576 = smul.addr %s575, 8
          %s577 = scalar_lea.vmem [#allocation3], %s576
          %578 = dma.done %s574, 128
        $region68: #{tpu_custom_call.1} parent=63 // pred_fallthru
          _
      $region64: #{tpu_custom_call.1} parent=5 // pred_fallthru
        _
    $region6: #{tpu_custom_call.1} parent=1 // loop_footer
      %s20 = sadd.s32 1, %s16
    $region7: #{tpu_custom_call.1} parent=1 // loop_footer_branch
      %15 = sbr.rel target = $region3
    $region8: #{tpu_custom_call.1} parent=1 // loop_exit
      _
    %579 = vsyncpa [#allocation4], 1
    %s580 = scalar_lea.sflag [#allocation4], 1
    %581 = vsyncpa %s580, 1

</llo_original>
